<compile_context>
chip_gen: v7x
topology: tpu7x:2x2x1
jax: 0.10.0
libtpu: 0.0.40
codegen_flags: <defaults>
</compile_context>

<pallas_src>
import jax
import jax.numpy as jnp
from jax.experimental import pallas as pl
from jax.experimental.pallas import tpu as pltpu


def _round_up(x: int, m: int) -> int:
    return (x + m - 1) // m * m


def mlp_kernel(x_ref, w1_ref, b1_ref, w2_ref, b2_ref, o_ref):
    # Layer 1: [tm, D] @ [D, H1p] + b1, ReLU   (f32 accumulation on the MXU)
    h = jnp.dot(x_ref[...], w1_ref[...], preferred_element_type=jnp.float32)
    h = jnp.maximum(h + b1_ref[...], 0.0)
    # Layer 2: [tm, H1p] @ [H1p, H2] + b2, ReLU
    y = jnp.dot(h, w2_ref[...], preferred_element_type=jnp.float32)
    y = jnp.maximum(y + b2_ref[...], 0.0)
    o_ref[...] = y.astype(o_ref.dtype)


def prepare_weights(w1, b1, w2, b2):
    """One-time setup: pad the hidden dim H1 -> multiple of 128 (lane-dense).

    Zero-padding is exact: padded H1 columns get w1-col = 0 and b1 = 0, so
    relu(0) = 0, and the matching padded rows of w2 are 0, contributing nothing.
    """
    D, H1 = w1.shape
    H2 = w2.shape[1]
    H1p = _round_up(H1, 128)
    w1p = jnp.zeros((D, H1p), w1.dtype).at[:, :H1].set(w1)
    b1p = jnp.zeros((1, H1p), b1.dtype).at[:, :H1].set(b1.reshape(1, H1))
    w2p = jnp.zeros((H1p, H2), w2.dtype).at[:H1, :].set(w2)
    b2p = b2.reshape(1, H2)
    return w1p, b1p, w2p, b2p


def main_mlp(x, w1p, b1p, w2p, b2p, *, tm=2048):
    """relu(relu(x @ w1 + b1) @ w2 + b2).

    x: [B, D] f32 (unpadded).  w1p/b1p/w2p/b2p come from `prepare_weights`.
    Returns [B, H2] f32 (unpadded).
    """
    B, D = x.shape
    H1p = w1p.shape[1]
    H2 = w2p.shape[1]
    assert w1p.shape[0] == D and b1p.shape == (1, H1p)
    assert w2p.shape == (H1p, H2) and b2p.shape == (1, H2)

    # Batch tile: either the whole (possibly unaligned) batch in one block
    # (block dim == full array dim is always legal), or a multiple-of-8 tile
    # with a ragged, masked last block.
    if B <= tm:
        tm_eff = B
    else:
        assert tm % 8 == 0, "tm must be a multiple of 8 (sublane)"
        tm_eff = tm
    grid = (pl.cdiv(B, tm_eff),)

    # Size the scoped VMEM limit from actual usage (+ headroom for the f32
    # hidden activations and Mosaic internal scratch) instead of hard-coding
    # the v7x physical maximum.
    itemsize = 4
    vmem_limit = int(
        2 * tm_eff * (D + H2) * itemsize                 # x / out double buffers
        + 2 * (D * H1p + H1p + H1p * H2 + H2) * itemsize  # resident weights
        + (16 << 20)                                      # headroom
    )
    vmem_limit = min(vmem_limit, 100 * 1024 * 1024)

    return pl.pallas_call(
        mlp_kernel,
        out_shape=jax.ShapeDtypeStruct((B, H2), jnp.float32),
        grid_spec=pltpu.PrefetchScalarGridSpec(
            num_scalar_prefetch=0,
            grid=grid,
            in_specs=[
                # streaming batch tile of activations (last dim == full D)
                pl.BlockSpec((tm_eff, D), lambda i: (i, 0)),
                # weights / biases: constant index_map -> resident, fetched once
                pl.BlockSpec((D, H1p), lambda i: (0, 0)),
                pl.BlockSpec((1, H1p), lambda i: (0, 0)),
                pl.BlockSpec((H1p, H2), lambda i: (0, 0)),
                pl.BlockSpec((1, H2), lambda i: (0, 0)),
            ],
            out_specs=pl.BlockSpec((tm_eff, H2), lambda i: (i, 0)),
        ),
        compiler_params=pltpu.CompilerParams(
            dimension_semantics=("parallel",),
            vmem_limit_bytes=vmem_limit,
        ),
    )(x, w1p, b1p, w2p, b2p)


def reference(x, w1, b1, w2, b2):
    h = jnp.maximum(x @ w1 + b1, 0.0)
    return jnp.maximum(h @ w2 + b2, 0.0)


if __name__ == "__main__":
    # Shapes consistent with MainMLP(input_dim=1118, hidden_dim1=64, hidden_dim2=32)
    D, H1, H2 = 1118, 64, 32

    key = jax.random.PRNGKey(0)
    kx, k1, kb1, k2, kb2 = jax.random.split(key, 5)

    # Deterministic init mimicking nn.Linear's U(-1/sqrt(fan_in), 1/sqrt(fan_in))
    bound1 = 1.0 / jnp.sqrt(jnp.float32(D))
    bound2 = 1.0 / jnp.sqrt(jnp.float32(H1))
    w1 = jax.random.uniform(k1, (D, H1), jnp.float32, -bound1, bound1)
    b1 = jax.random.uniform(kb1, (1, H1), jnp.float32, -bound1, bound1)
    w2 = jax.random.uniform(k2, (H1, H2), jnp.float32, -bound2, bound2)
    b2 = jax.random.uniform(kb2, (1, H2), jnp.float32, -bound2, bound2)

    # Weight padding hoisted out of the per-call path (call-invariant).
    w1p, b1p, w2p, b2p = prepare_weights(w1, b1, w2, b2)

    ok = True
    # B=8: aligned single block; B=13: unaligned single block (block == full B);
    # B=40 with tm=16: multi-step grid with a ragged, masked last block.
    for B, tm in ((8, 2048), (13, 2048), (40, 16)):
        x = jax.random.normal(jax.random.fold_in(kx, B), (B, D), jnp.float32)
        out = jax.block_until_ready(main_mlp(x, w1p, b1p, w2p, b2p, tm=tm))
        ref = reference(x, w1, b1, w2, b2)
        ok = ok and out.shape == (B, H2)
        ok = ok and bool(jnp.allclose(out, ref, atol=1e-4, rtol=1e-4))

    assert ok
    print("KERNEL_OK")
</pallas_src>

<mosaic_0001>
module attributes {stable_mosaic.version = 11 : i64} {
  func.func @mlp_kernel(%arg0: i32, %arg1: memref<8x1118xf32, #tpu.memory_space<vmem>>, %arg2: memref<1118x128xf32, #tpu.memory_space<vmem>>, %arg3: memref<1x128xf32, #tpu.memory_space<vmem>>, %arg4: memref<128x32xf32, #tpu.memory_space<vmem>>, %arg5: memref<1x32xf32, #tpu.memory_space<vmem>>, %arg6: memref<8x32xf32, #tpu.memory_space<vmem>>) attributes {dimension_semantics = [#tpu.dimension_semantics<parallel>], iteration_bounds = array<i64: 1>, scalar_prefetch = 0 : i64, scratch_operands = 0 : i64, tpu.core_type = #tpu.core_type<tc>, window_params = [{transform_indices = @transform_0, window_bounds = array<i64: 8, 1118>}, {pipeline_mode = #tpu.pipeline_mode<synchronous>, transform_indices = @transform_1, window_bounds = array<i64: 1118, 128>}, {pipeline_mode = #tpu.pipeline_mode<synchronous>, transform_indices = @transform_2, window_bounds = array<i64: 1, 128>}, {pipeline_mode = #tpu.pipeline_mode<synchronous>, transform_indices = @transform_3, window_bounds = array<i64: 128, 32>}, {pipeline_mode = #tpu.pipeline_mode<synchronous>, transform_indices = @transform_4, window_bounds = array<i64: 1, 32>}, {transform_indices = @transform_5, window_bounds = array<i64: 8, 32>}]} {
    %c0 = arith.constant 0 : index
    %c0_0 = arith.constant 0 : index
    %0 = vector.load %arg1[%c0, %c0_0] : memref<8x1118xf32, #tpu.memory_space<vmem>>, vector<8x1118xf32>
    %c0_1 = arith.constant 0 : index
    %c0_2 = arith.constant 0 : index
    %1 = vector.load %arg2[%c0_1, %c0_2] : memref<1118x128xf32, #tpu.memory_space<vmem>>, vector<1118x128xf32>
    %cst = arith.constant dense<0.000000e+00> : vector<8x128xf32>
    %2 = tpu.matmul %0, %1, %cst {dimension_numbers = #tpu.dot_dimension_numbers<[1], [0], [0], [1], [0, 0, 1, 1], [], []>} : vector<8x1118xf32>, vector<1118x128xf32>, vector<8x128xf32> -> vector<8x128xf32>
    %c0_3 = arith.constant 0 : index
    %c0_4 = arith.constant 0 : index
    %3 = vector.load %arg3[%c0_3, %c0_4] : memref<1x128xf32, #tpu.memory_space<vmem>>, vector<1x128xf32>
    %4 = vector.broadcast %3 : vector<1x128xf32> to vector<8x128xf32>
    %5 = arith.addf %2, %4 : vector<8x128xf32>
    %cst_5 = arith.constant 0.000000e+00 : f32
    %6 = vector.broadcast %cst_5 : f32 to vector<8x128xf32>
    %7 = arith.maximumf %5, %6 : vector<8x128xf32>
    %c0_6 = arith.constant 0 : index
    %c0_7 = arith.constant 0 : index
    %8 = vector.load %arg4[%c0_6, %c0_7] : memref<128x32xf32, #tpu.memory_space<vmem>>, vector<128x32xf32>
    %cst_8 = arith.constant dense<0.000000e+00> : vector<8x32xf32>
    %9 = tpu.matmul %7, %8, %cst_8 {dimension_numbers = #tpu.dot_dimension_numbers<[1], [0], [0], [1], [0, 0, 1, 1], [], []>} : vector<8x128xf32>, vector<128x32xf32>, vector<8x32xf32> -> vector<8x32xf32>
    %c0_9 = arith.constant 0 : index
    %c0_10 = arith.constant 0 : index
    %10 = vector.load %arg5[%c0_9, %c0_10] : memref<1x32xf32, #tpu.memory_space<vmem>>, vector<1x32xf32>
    %11 = vector.broadcast %10 : vector<1x32xf32> to vector<8x32xf32>
    %12 = arith.addf %9, %11 : vector<8x32xf32>
    %cst_11 = arith.constant 0.000000e+00 : f32
    %13 = vector.broadcast %cst_11 : f32 to vector<8x32xf32>
    %14 = arith.maximumf %12, %13 : vector<8x32xf32>
    %c0_12 = arith.constant 0 : index
    %c0_13 = arith.constant 0 : index
    %15 = vector.load %arg6[%c0_12, %c0_13] : memref<8x32xf32, #tpu.memory_space<vmem>>, vector<8x32xf32>
    tpu.vector_store %arg6[%c0_12, %c0_13], %14 {strides = array<i32>} : memref<8x32xf32, #tpu.memory_space<vmem>>, vector<8x32xf32>,
    return
  }
  func.func @transform_0(%arg0: i32) -> (i32, i32) {
    %c0_i32 = arith.constant 0 : i32
    %c0_i32_0 = arith.constant 0 : i32
    return %arg0, %c0_i32 : i32, i32
  }
  func.func @transform_1(%arg0: i32) -> (i32, i32) {
    %c0_i32 = arith.constant 0 : i32
    %c0_i32_0 = arith.constant 0 : i32
    %c0_i32_1 = arith.constant 0 : i32
    return %c0_i32, %c0_i32_0 : i32, i32
  }
  func.func @transform_2(%arg0: i32) -> (i32, i32) {
    %c0_i32 = arith.constant 0 : i32
    %c0_i32_0 = arith.constant 0 : i32
    %c0_i32_1 = arith.constant 0 : i32
    return %c0_i32, %c0_i32_0 : i32, i32
  }
  func.func @transform_3(%arg0: i32) -> (i32, i32) {
    %c0_i32 = arith.constant 0 : i32
    %c0_i32_0 = arith.constant 0 : i32
    %c0_i32_1 = arith.constant 0 : i32
    return %c0_i32, %c0_i32_0 : i32, i32
  }
  func.func @transform_4(%arg0: i32) -> (i32, i32) {
    %c0_i32 = arith.constant 0 : i32
    %c0_i32_0 = arith.constant 0 : i32
    %c0_i32_1 = arith.constant 0 : i32
    return %c0_i32, %c0_i32_0 : i32, i32
  }
  func.func @transform_5(%arg0: i32) -> (i32, i32) {
    %c0_i32 = arith.constant 0 : i32
    %c0_i32_0 = arith.constant 0 : i32
    return %arg0, %c0_i32 : i32, i32
  }
}

</mosaic_0001>

<llo_original>
// kernel: tpu_custom_call.1
$region0: #{tpu_custom_call.1}
  #allocation0 [shape = 'u32[]', space=smem, size = 0x4, offset = 0x4, fixed_abs, tag = 'smem constant byte address 0x4 - core index']
  #allocation1 [shape = 'u32[144,128]{1,0:T(1,128)}', space=vmem, size = 0x12000, scoped, tag = 'internal scratch']
  %s0 = inlined_call_operand.vmem [shape: f32[8,1118], index: 0, kind: input, shape index: {}]
  %s1 = inlined_call_operand.hbm [shape: f32[1118,128], index: 1, kind: input, shape index: {}]
  %s2 = inlined_call_operand.vmem [shape: f32[1,128], index: 2, kind: input, shape index: {}]
  %s3 = inlined_call_operand.vmem [shape: f32[128,32], index: 3, kind: input, shape index: {}]
  %s4 = inlined_call_operand.vmem [shape: f32[1,32], index: 4, kind: input, shape index: {}]
  %s5 = inlined_call_operand.hbm [shape: f32[8,32], index: 5, kind: output, shape index: {}]
  %s6 = sld [smem:[#allocation0]]
  $region34: #{tpu_custom_call.1} parent=0
    _
  %s8 = ssub.s32 1, %s6
  %s9 = scalar_select 0, %s8, %s6
  $region1: #{tpu_custom_call.1} parent=0
    #allocation2 [shape = 'u8[573440]{0}', space=vmem, size = 0x8c000, scoped, tag = 'input window, operand 1, single buffered']
    #allocation3 [shape = 's32[1]{0}', space=sflag, size = 0x4, scoped, tag = 'scoped memory for tpu_custom_call.1']
    #allocation4 [shape = 's32[1]{0}', space=sflag, size = 0x4, scoped, tag = 'scoped memory for tpu_custom_call.1']
    #allocation5 [shape = 'u8[4096]{0}', space=vmem, size = 0x1000, scoped, tag = 'output window, operand 0, single buffered']
    %10 = vsyncpa [#allocation3], 0
    %11 = vsyncpa [#allocation4], 0
    // Predicated region
    $region2: #{tpu_custom_call.1} parent=1 // pred_check
      _
    $region3: #{tpu_custom_call.1} parent=1 // pred_check_branch
      %13 = sbr.rel (0) target = $region5
    $region4: #{tpu_custom_call.1} parent=1 // pred_region
      _
    $region5: #{tpu_custom_call.1} parent=1 // pred_fallthru
      _
    // Predicated region
    $region6: #{tpu_custom_call.1} parent=1 // pred_check
      _
    $region7: #{tpu_custom_call.1} parent=1 // pred_check_branch
      %15 = sbr.rel (0) target = $region9
    $region8: #{tpu_custom_call.1} parent=1 // pred_region
      %s17 = ssub.s32 17920, 17920
      %18 = vsyncadd [#allocation3], %s17
      %s19 = sshll.u32 [#allocation2], 4
      %s20 = int_to_ptr.vmem [resolvable:$true] %s19
      %25 = dma.hbm_to_vmem [thread:$0]  %s1, 17920, %s20, [#allocation3], 128, 128, 8
    $region9: #{tpu_custom_call.1} parent=1 // pred_fallthru
      _
    // Predicated region
    $region10: #{tpu_custom_call.1} parent=1 // pred_check
      _
    $region11: #{tpu_custom_call.1} parent=1 // pred_check_branch
      %27 = sbr.rel (0) target = $region13
    $region12: #{tpu_custom_call.1} parent=1 // pred_region
      _
    $region13: #{tpu_custom_call.1} parent=1 // pred_fallthru
      _
    // Predicated region
    $region14: #{tpu_custom_call.1} parent=1 // pred_check
      _
    $region15: #{tpu_custom_call.1} parent=1 // pred_check_branch
      %29 = sbr.rel (0) target = $region17
    $region16: #{tpu_custom_call.1} parent=1 // pred_region
      _
    $region17: #{tpu_custom_call.1} parent=1 // pred_fallthru
      _
    // Predicated region
    $region18: #{tpu_custom_call.1} parent=1 // pred_check
      _
    $region19: #{tpu_custom_call.1} parent=1 // pred_check_branch
      %31 = sbr.rel (0) target = $region21
    $region20: #{tpu_custom_call.1} parent=1 // pred_region
      _
    $region21: #{tpu_custom_call.1} parent=1 // pred_fallthru
      _
    // Predicated region
    $region22: #{tpu_custom_call.1} parent=1 // pred_check
      _
    $region23: #{tpu_custom_call.1} parent=1 // pred_check_branch
      %33 = sbr.rel (0) target = $region25
    $region24: #{tpu_custom_call.1} parent=1 // pred_region
      %34 = dma.done [#allocation3], 17920
    $region25: #{tpu_custom_call.1} parent=1 // pred_fallthru
      _
    %v35 = vld [vmem:[%s0] sm:$0xff]
    %v36 = vld [vmem:[%s0 + $0x8] sm:$0xff]
    %v37 = vld [vmem:[%s0 + $0x10] sm:$0xff]
    %v38 = vld [vmem:[%s0 + $0x18] sm:$0xff]
    %v39 = vld [vmem:[%s0 + $0x20] sm:$0xff]
    %v40 = vld [vmem:[%s0 + $0x28] sm:$0xff]
    %v41 = vld [vmem:[%s0 + $0x30] sm:$0xff]
    %v42 = vld [vmem:[%s0 + $0x38] sm:$0xff]
    %v43 = vld [vmem:[%s0 + $0x40] sm:$0xff]
    %v44 = vld [vmem:[#allocation2] sm:$0xff]
    %v45 = vld [vmem:[#allocation2 + $0x8] sm:$0xff]
    %v46 = vld [vmem:[#allocation2 + $0x10] sm:$0xff]
    %v47 = vld [vmem:[#allocation2 + $0x18] sm:$0xff]
    %v48 = vld [vmem:[#allocation2 + $0x20] sm:$0xff]
    %v49 = vld [vmem:[#allocation2 + $0x28] sm:$0xff]
    %v50 = vld [vmem:[#allocation2 + $0x30] sm:$0xff]
    %v51 = vld [vmem:[#allocation2 + $0x38] sm:$0xff]
    %v52 = vld [vmem:[#allocation2 + $0x40] sm:$0xff]
    %v53 = vld [vmem:[#allocation2 + $0x48] sm:$0xff]
    %v54 = vld [vmem:[#allocation2 + $0x50] sm:$0xff]
    %v55 = vld [vmem:[#allocation2 + $0x58] sm:$0xff]
    %v56 = vld [vmem:[#allocation2 + $0x60] sm:$0xff]
    %v57 = vld [vmem:[#allocation2 + $0x68] sm:$0xff]
    %v58 = vld [vmem:[#allocation2 + $0x70] sm:$0xff]
    %v59 = vld [vmem:[#allocation2 + $0x78] sm:$0xff]
    %v60 = vld [vmem:[#allocation2 + $0x80] sm:$0xff]
    %v61 = vld [vmem:[#allocation2 + $0x88] sm:$0xff]
    %v62 = vld [vmem:[#allocation2 + $0x90] sm:$0xff]
    %v63 = vld [vmem:[#allocation2 + $0x98] sm:$0xff]
    %v64 = vld [vmem:[#allocation2 + $0xa0] sm:$0xff]
    %v65 = vld [vmem:[#allocation2 + $0xa8] sm:$0xff]
    %v66 = vld [vmem:[#allocation2 + $0xb0] sm:$0xff]
    %v67 = vld [vmem:[#allocation2 + $0xb8] sm:$0xff]
    %v68 = vld [vmem:[#allocation2 + $0xc0] sm:$0xff]
    %v69 = vld [vmem:[#allocation2 + $0xc8] sm:$0xff]
    %v70 = vld [vmem:[#allocation2 + $0xd0] sm:$0xff]
    %v71 = vld [vmem:[#allocation2 + $0xd8] sm:$0xff]
    %v72 = vld [vmem:[#allocation2 + $0xe0] sm:$0xff]
    %v73 = vld [vmem:[#allocation2 + $0xe8] sm:$0xff]
    %v74 = vld [vmem:[#allocation2 + $0xf0] sm:$0xff]
    %v75 = vld [vmem:[#allocation2 + $0xf8] sm:$0xff]
    %v76 = vld [vmem:[#allocation2 + $0x100] sm:$0xff]
    %v77 = vld [vmem:[#allocation2 + $0x108] sm:$0xff]
    %v78 = vld [vmem:[#allocation2 + $0x110] sm:$0xff]
    %v79 = vld [vmem:[#allocation2 + $0x118] sm:$0xff]
    %v80 = vld [vmem:[#allocation2 + $0x120] sm:$0xff]
    %v81 = vld [vmem:[#allocation2 + $0x128] sm:$0xff]
    %v82 = vld [vmem:[#allocation2 + $0x130] sm:$0xff]
    %v83 = vld [vmem:[#allocation2 + $0x138] sm:$0xff]
    %v84 = vld [vmem:[#allocation2 + $0x140] sm:$0xff]
    %v85 = vld [vmem:[#allocation2 + $0x148] sm:$0xff]
    %v86 = vld [vmem:[#allocation2 + $0x150] sm:$0xff]
    %v87 = vld [vmem:[#allocation2 + $0x158] sm:$0xff]
    %v88 = vld [vmem:[#allocation2 + $0x160] sm:$0xff]
    %v89 = vld [vmem:[#allocation2 + $0x168] sm:$0xff]
    %v90 = vld [vmem:[#allocation2 + $0x170] sm:$0xff]
    %v91 = vld [vmem:[#allocation2 + $0x178] sm:$0xff]
    %v92 = vld [vmem:[#allocation2 + $0x180] sm:$0xff]
    %v93 = vld [vmem:[#allocation2 + $0x188] sm:$0xff]
    %v94 = vld [vmem:[#allocation2 + $0x190] sm:$0xff]
    %v95 = vld [vmem:[#allocation2 + $0x198] sm:$0xff]
    %v96 = vld [vmem:[#allocation2 + $0x1a0] sm:$0xff]
    %v97 = vld [vmem:[#allocation2 + $0x1a8] sm:$0xff]
    %v98 = vld [vmem:[#allocation2 + $0x1b0] sm:$0xff]
    %v99 = vld [vmem:[#allocation2 + $0x1b8] sm:$0xff]
    %v100 = vld [vmem:[#allocation2 + $0x1c0] sm:$0xff]
    %v101 = vld [vmem:[#allocation2 + $0x1c8] sm:$0xff]
    %v102 = vld [vmem:[#allocation2 + $0x1d0] sm:$0xff]
    %v103 = vld [vmem:[#allocation2 + $0x1d8] sm:$0xff]
    %v104 = vld [vmem:[#allocation2 + $0x1e0] sm:$0xff]
    %v105 = vld [vmem:[#allocation2 + $0x1e8] sm:$0xff]
    %v106 = vld [vmem:[#allocation2 + $0x1f0] sm:$0xff]
    %v107 = vld [vmem:[#allocation2 + $0x1f8] sm:$0xff]
    %v108 = vld [vmem:[#allocation2 + $0x200] sm:$0xff]
    %v109 = vld [vmem:[#allocation2 + $0x208] sm:$0xff]
    %v110 = vld [vmem:[#allocation2 + $0x210] sm:$0xff]
    %v111 = vld [vmem:[#allocation2 + $0x218] sm:$0xff]
    %v112 = vld [vmem:[#allocation2 + $0x220] sm:$0xff]
    %v113 = vld [vmem:[#allocation2 + $0x228] sm:$0xff]
    %v114 = vld [vmem:[#allocation2 + $0x230] sm:$0xff]
    %v115 = vld [vmem:[#allocation2 + $0x238] sm:$0xff]
    %v116 = vld [vmem:[#allocation2 + $0x240] sm:$0xff]
    %v117 = vld [vmem:[#allocation2 + $0x248] sm:$0xff]
    %v118 = vld [vmem:[#allocation2 + $0x250] sm:$0xff]
    %v119 = vld [vmem:[#allocation2 + $0x258] sm:$0xff]
    %v120 = vld [vmem:[#allocation2 + $0x260] sm:$0xff]
    %v121 = vld [vmem:[#allocation2 + $0x268] sm:$0xff]
    %v122 = vld [vmem:[#allocation2 + $0x270] sm:$0xff]
    %v123 = vld [vmem:[#allocation2 + $0x278] sm:$0xff]
    %v124 = vld [vmem:[#allocation2 + $0x280] sm:$0xff]
    %v125 = vld [vmem:[#allocation2 + $0x288] sm:$0xff]
    %v126 = vld [vmem:[#allocation2 + $0x290] sm:$0xff]
    %v127 = vld [vmem:[#allocation2 + $0x298] sm:$0xff]
    %v128 = vld [vmem:[#allocation2 + $0x2a0] sm:$0xff]
    %v129 = vld [vmem:[#allocation2 + $0x2a8] sm:$0xff]
    %v130 = vld [vmem:[#allocation2 + $0x2b0] sm:$0xff]
    %v131 = vld [vmem:[#allocation2 + $0x2b8] sm:$0xff]
    %v132 = vld [vmem:[#allocation2 + $0x2c0] sm:$0xff]
    %v133 = vld [vmem:[#allocation2 + $0x2c8] sm:$0xff]
    %v134 = vld [vmem:[#allocation2 + $0x2d0] sm:$0xff]
    %v135 = vld [vmem:[#allocation2 + $0x2d8] sm:$0xff]
    %v136 = vld [vmem:[#allocation2 + $0x2e0] sm:$0xff]
    %v137 = vld [vmem:[#allocation2 + $0x2e8] sm:$0xff]
    %v138 = vld [vmem:[#allocation2 + $0x2f0] sm:$0xff]
    %v139 = vld [vmem:[#allocation2 + $0x2f8] sm:$0xff]
    %v140 = vld [vmem:[#allocation2 + $0x300] sm:$0xff]
    %v141 = vld [vmem:[#allocation2 + $0x308] sm:$0xff]
    %v142 = vld [vmem:[#allocation2 + $0x310] sm:$0xff]
    %v143 = vld [vmem:[#allocation2 + $0x318] sm:$0xff]
    %v144 = vld [vmem:[#allocation2 + $0x320] sm:$0xff]
    %v145 = vld [vmem:[#allocation2 + $0x328] sm:$0xff]
    %v146 = vld [vmem:[#allocation2 + $0x330] sm:$0xff]
    %v147 = vld [vmem:[#allocation2 + $0x338] sm:$0xff]
    %v148 = vld [vmem:[#allocation2 + $0x340] sm:$0xff]
    %v149 = vld [vmem:[#allocation2 + $0x348] sm:$0xff]
    %v150 = vld [vmem:[#allocation2 + $0x350] sm:$0xff]
    %v151 = vld [vmem:[#allocation2 + $0x358] sm:$0xff]
    %v152 = vld [vmem:[#allocation2 + $0x360] sm:$0xff]
    %v153 = vld [vmem:[#allocation2 + $0x368] sm:$0xff]
    %v154 = vld [vmem:[#allocation2 + $0x370] sm:$0xff]
    %v155 = vld [vmem:[#allocation2 + $0x378] sm:$0xff]
    %v156 = vld [vmem:[#allocation2 + $0x380] sm:$0xff]
    %v157 = vld [vmem:[#allocation2 + $0x388] sm:$0xff]
    %v158 = vld [vmem:[#allocation2 + $0x390] sm:$0xff]
    %v159 = vld [vmem:[#allocation2 + $0x398] sm:$0xff]
    %v160 = vld [vmem:[#allocation2 + $0x3a0] sm:$0xff]
    %v161 = vld [vmem:[#allocation2 + $0x3a8] sm:$0xff]
    %v162 = vld [vmem:[#allocation2 + $0x3b0] sm:$0xff]
    %v163 = vld [vmem:[#allocation2 + $0x3b8] sm:$0xff]
    %v164 = vld [vmem:[#allocation2 + $0x3c0] sm:$0xff]
    %v165 = vld [vmem:[#allocation2 + $0x3c8] sm:$0xff]
    %v166 = vld [vmem:[#allocation2 + $0x3d0] sm:$0xff]
    %v167 = vld [vmem:[#allocation2 + $0x3d8] sm:$0xff]
    %v168 = vld [vmem:[#allocation2 + $0x3e0] sm:$0xff]
    %v169 = vld [vmem:[#allocation2 + $0x3e8] sm:$0xff]
    %v170 = vld [vmem:[#allocation2 + $0x3f0] sm:$0xff]
    %v171 = vld [vmem:[#allocation2 + $0x3f8] sm:$0xff]
    %v172 = vld [vmem:[#allocation2 + $0x400] sm:$0xff]
    %v173 = vld [vmem:[#allocation2 + $0x408] sm:$0xff]
    %v174 = vld [vmem:[#allocation2 + $0x410] sm:$0xff]
    %v175 = vld [vmem:[#allocation2 + $0x418] sm:$0xff]
    %v176 = vld [vmem:[#allocation2 + $0x420] sm:$0xff]
    %v177 = vld [vmem:[#allocation2 + $0x428] sm:$0xff]
    %v178 = vld [vmem:[#allocation2 + $0x430] sm:$0xff]
    %v179 = vld [vmem:[#allocation2 + $0x438] sm:$0xff]
    %v180 = vld [vmem:[#allocation2 + $0x440] sm:$0xff]
    %v181 = vld [vmem:[#allocation2 + $0x448] sm:$0xff]
    %v182 = vld [vmem:[#allocation2 + $0x450] sm:$0xff]
    %v183 = vld [vmem:[#allocation2 + $0x458] sm:$0x3f]
    %v184 = vld [vmem:[%s2] sm:$0x1]
    %v186 = vlaneseq
    %v187 = vshrl.u32 %v186, 7
    %v188 = vsub.s32 0, %v187
    %v189 = vrot.slane %v184, %v188
    %vm191 = vcmask 769024
    %v193 = vsel %vm191, %v43, 0
    %vm195 = vcmask 1045504
    %v197 = vsel %vm195, %v183, 0
    %199 = vmatprep.subr.mxu0 0.0
    %200 = vmatpush1.msra.mxu0 %v44
    %201 = vmatprep.subr.mxu0 0.0
    %202 = vmatpush1.msra.mxu0 %v45
    %203 = vmatprep.subr.mxu0 0.0
    %204 = vmatpush1.msra.mxu0 %v46
    %205 = vmatprep.subr.mxu0 0.0
    %206 = vmatpush1.msra.mxu0 %v47
    %207 = vmatprep.subr.mxu0 0.0
    %208 = vmatpush1.msra.mxu0 %v48
    %209 = vmatprep.subr.mxu0 0.0
    %210 = vmatpush1.msra.mxu0 %v49
    %211 = vmatprep.subr.mxu0 0.0
    %212 = vmatpush1.msra.mxu0 %v50
    %213 = vmatprep.subr.mxu0 0.0
    %214 = vmatpush1.msra.mxu0 %v51
    %215 = vmatprep.subr.mxu0 0.0
    %216 = vmatpush1.msra.mxu0 %v52
    %217 = vmatprep.subr.mxu0 0.0
    %218 = vmatpush1.msra.mxu0 %v53
    %219 = vmatprep.subr.mxu0 0.0
    %220 = vmatpush1.msra.mxu0 %v54
    %221 = vmatprep.subr.mxu0 0.0
    %222 = vmatpush1.msra.mxu0 %v55
    %223 = vmatprep.subr.mxu0 0.0
    %224 = vmatpush1.msra.mxu0 %v56
    %225 = vmatprep.subr.mxu0 0.0
    %226 = vmatpush1.msra.mxu0 %v57
    %227 = vmatprep.subr.mxu0 0.0
    %228 = vmatpush1.msra.mxu0 %v58
    %229 = vmatprep.subr.mxu0 0.0
    %230 = vmatpush1.msra.mxu0 %v59
    %231 = vmatprep.subr.mxu0 0.0
    %232 = vmatpush1.msra.mxu0 %v60
    %233 = vmatprep.subr.mxu0 0.0
    %234 = vmatpush1.msra.mxu0 %v61
    %235 = vmatprep.subr.mxu0 0.0
    %236 = vmatpush1.msra.mxu0 %v62
    %237 = vmatprep.subr.mxu0 0.0
    %238 = vmatpush1.msra.mxu0 %v63
    %239 = vmatprep.subr.mxu0 0.0
    %240 = vmatpush1.msra.mxu0 %v64
    %241 = vmatprep.subr.mxu0 0.0
    %242 = vmatpush1.msra.mxu0 %v65
    %243 = vmatprep.subr.mxu0 0.0
    %244 = vmatpush1.msra.mxu0 %v66
    %245 = vmatprep.subr.mxu0 0.0
    %246 = vmatpush1.msra.mxu0 %v67
    %247 = vmatprep.subr.mxu0 0.0
    %248 = vmatpush1.msra.mxu0 %v68
    %249 = vmatprep.subr.mxu0 0.0
    %250 = vmatpush1.msra.mxu0 %v69
    %251 = vmatprep.subr.mxu0 0.0
    %252 = vmatpush1.msra.mxu0 %v70
    %253 = vmatprep.subr.mxu0 0.0
    %254 = vmatpush1.msra.mxu0 %v71
    %255 = vmatprep.subr.mxu0 0.0
    %256 = vmatpush1.msra.mxu0 %v72
    %257 = vmatprep.subr.mxu0 0.0
    %258 = vmatpush1.msra.mxu0 %v73
    %259 = vmatprep.subr.mxu0 0.0
    %260 = vmatpush1.msra.mxu0 %v74
    %261 = vmatprep.subr.mxu0 0.0
    %262 = vmatpush1.msra.mxu0 %v75
    %263 = vmatprep.mubr.f32.mxu0 %v36
    %264 = vmatmul.mubr.f32.gmra.mrb[0].mxu0 %v35
    %v265 = vpop.f32.mrb[0].mxu0
    %v266 = vadd.f32 %v189, %v265
    %v267 = vpop.f32.mrb[0].mxu0
    %268 = vdwg.mxu0
    %269 = vmatprep.subr.mxu0 0.0
    %270 = vmatpush1.msra.mxu0 %v76
    %271 = vmatprep.subr.mxu0 0.0
    %272 = vmatpush1.msra.mxu0 %v77
    %273 = vmatprep.subr.mxu0 0.0
    %274 = vmatpush1.msra.mxu0 %v78
    %275 = vmatprep.subr.mxu0 0.0
    %276 = vmatpush1.msra.mxu0 %v79
    %277 = vmatprep.subr.mxu0 0.0
    %278 = vmatpush1.msra.mxu0 %v80
    %279 = vmatprep.subr.mxu0 0.0
    %280 = vmatpush1.msra.mxu0 %v81
    %281 = vmatprep.subr.mxu0 0.0
    %282 = vmatpush1.msra.mxu0 %v82
    %283 = vmatprep.subr.mxu0 0.0
    %284 = vmatpush1.msra.mxu0 %v83
    %285 = vmatprep.subr.mxu0 0.0
    %286 = vmatpush1.msra.mxu0 %v84
    %287 = vmatprep.subr.mxu0 0.0
    %288 = vmatpush1.msra.mxu0 %v85
    %289 = vmatprep.subr.mxu0 0.0
    %290 = vmatpush1.msra.mxu0 %v86
    %291 = vmatprep.subr.mxu0 0.0
    %292 = vmatpush1.msra.mxu0 %v87
    %293 = vmatprep.subr.mxu0 0.0
    %294 = vmatpush1.msra.mxu0 %v88
    %295 = vmatprep.subr.mxu0 0.0
    %296 = vmatpush1.msra.mxu0 %v89
    %297 = vmatprep.subr.mxu0 0.0
    %298 = vmatpush1.msra.mxu0 %v90
    %299 = vmatprep.subr.mxu0 0.0
    %300 = vmatpush1.msra.mxu0 %v91
    %301 = vmatprep.subr.mxu0 0.0
    %302 = vmatpush1.msra.mxu0 %v92
    %303 = vmatprep.subr.mxu0 0.0
    %304 = vmatpush1.msra.mxu0 %v93
    %305 = vmatprep.subr.mxu0 0.0
    %306 = vmatpush1.msra.mxu0 %v94
    %307 = vmatprep.subr.mxu0 0.0
    %308 = vmatpush1.msra.mxu0 %v95
    %309 = vmatprep.subr.mxu0 0.0
    %310 = vmatpush1.msra.mxu0 %v96
    %311 = vmatprep.subr.mxu0 0.0
    %312 = vmatpush1.msra.mxu0 %v97
    %313 = vmatprep.subr.mxu0 0.0
    %314 = vmatpush1.msra.mxu0 %v98
    %315 = vmatprep.subr.mxu0 0.0
    %316 = vmatpush1.msra.mxu0 %v99
    %317 = vmatprep.subr.mxu0 0.0
    %318 = vmatpush1.msra.mxu0 %v100
    %319 = vmatprep.subr.mxu0 0.0
    %320 = vmatpush1.msra.mxu0 %v101
    %321 = vmatprep.subr.mxu0 0.0
    %322 = vmatpush1.msra.mxu0 %v102
    %323 = vmatprep.subr.mxu0 0.0
    %324 = vmatpush1.msra.mxu0 %v103
    %325 = vmatprep.subr.mxu0 0.0
    %326 = vmatpush1.msra.mxu0 %v104
    %327 = vmatprep.subr.mxu0 0.0
    %328 = vmatpush1.msra.mxu0 %v105
    %329 = vmatprep.subr.mxu0 0.0
    %330 = vmatpush1.msra.mxu0 %v106
    %331 = vmatprep.subr.mxu0 0.0
    %332 = vmatpush1.msra.mxu0 %v107
    %333 = vmatprep.mubr.f32.mxu0 %v38
    %334 = vmatmul.mubr.f32.gmra.mrb[0].mxu0 %v37
    %v335 = vpop.f32.mrb[0].mxu0
    %v336 = vadd.f32 %v266, %v335
    %v337 = vpop.f32.mrb[0].mxu0
    %338 = vdwg.mxu0
    %339 = vmatprep.subr.mxu0 0.0
    %340 = vmatpush1.msra.mxu0 %v108
    %341 = vmatprep.subr.mxu0 0.0
    %342 = vmatpush1.msra.mxu0 %v109
    %343 = vmatprep.subr.mxu0 0.0
    %344 = vmatpush1.msra.mxu0 %v110
    %345 = vmatprep.subr.mxu0 0.0
    %346 = vmatpush1.msra.mxu0 %v111
    %347 = vmatprep.subr.mxu0 0.0
    %348 = vmatpush1.msra.mxu0 %v112
    %349 = vmatprep.subr.mxu0 0.0
    %350 = vmatpush1.msra.mxu0 %v113
    %351 = vmatprep.subr.mxu0 0.0
    %352 = vmatpush1.msra.mxu0 %v114
    %353 = vmatprep.subr.mxu0 0.0
    %354 = vmatpush1.msra.mxu0 %v115
    %355 = vmatprep.subr.mxu0 0.0
    %356 = vmatpush1.msra.mxu0 %v116
    %357 = vmatprep.subr.mxu0 0.0
    %358 = vmatpush1.msra.mxu0 %v117
    %359 = vmatprep.subr.mxu0 0.0
    %360 = vmatpush1.msra.mxu0 %v118
    %361 = vmatprep.subr.mxu0 0.0
    %362 = vmatpush1.msra.mxu0 %v119
    %363 = vmatprep.subr.mxu0 0.0
    %364 = vmatpush1.msra.mxu0 %v120
    %365 = vmatprep.subr.mxu0 0.0
    %366 = vmatpush1.msra.mxu0 %v121
    %367 = vmatprep.subr.mxu0 0.0
    %368 = vmatpush1.msra.mxu0 %v122
    %369 = vmatprep.subr.mxu0 0.0
    %370 = vmatpush1.msra.mxu0 %v123
    %371 = vmatprep.subr.mxu0 0.0
    %372 = vmatpush1.msra.mxu0 %v124
    %373 = vmatprep.subr.mxu0 0.0
    %374 = vmatpush1.msra.mxu0 %v125
    %375 = vmatprep.subr.mxu0 0.0
    %376 = vmatpush1.msra.mxu0 %v126
    %377 = vmatprep.subr.mxu0 0.0
    %378 = vmatpush1.msra.mxu0 %v127
    %379 = vmatprep.subr.mxu0 0.0
    %380 = vmatpush1.msra.mxu0 %v128
    %381 = vmatprep.subr.mxu0 0.0
    %382 = vmatpush1.msra.mxu0 %v129
    %383 = vmatprep.subr.mxu0 0.0
    %384 = vmatpush1.msra.mxu0 %v130
    %385 = vmatprep.subr.mxu0 0.0
    %386 = vmatpush1.msra.mxu0 %v131
    %387 = vmatprep.subr.mxu0 0.0
    %388 = vmatpush1.msra.mxu0 %v132
    %389 = vmatprep.subr.mxu0 0.0
    %390 = vmatpush1.msra.mxu0 %v133
    %391 = vmatprep.subr.mxu0 0.0
    %392 = vmatpush1.msra.mxu0 %v134
    %393 = vmatprep.subr.mxu0 0.0
    %394 = vmatpush1.msra.mxu0 %v135
    %395 = vmatprep.subr.mxu0 0.0
    %396 = vmatpush1.msra.mxu0 %v136
    %397 = vmatprep.subr.mxu0 0.0
    %398 = vmatpush1.msra.mxu0 %v137
    %399 = vmatprep.subr.mxu0 0.0
    %400 = vmatpush1.msra.mxu0 %v138
    %401 = vmatprep.subr.mxu0 0.0
    %402 = vmatpush1.msra.mxu0 %v139
    %403 = vmatprep.mubr.f32.mxu0 %v40
    %404 = vmatmul.mubr.f32.gmra.mrb[0].mxu0 %v39
    %v405 = vpop.f32.mrb[0].mxu0
    %v406 = vadd.f32 %v336, %v405
    %v407 = vpop.f32.mrb[0].mxu0
    %408 = vdwg.mxu0
    %409 = vmatprep.subr.mxu0 0.0
    %410 = vmatpush1.msra.mxu0 %v140
    %411 = vmatprep.subr.mxu0 0.0
    %412 = vmatpush1.msra.mxu0 %v141
    %413 = vmatprep.subr.mxu0 0.0
    %414 = vmatpush1.msra.mxu0 %v142
    %415 = vmatprep.subr.mxu0 0.0
    %416 = vmatpush1.msra.mxu0 %v143
    %417 = vmatprep.subr.mxu0 0.0
    %418 = vmatpush1.msra.mxu0 %v144
    %419 = vmatprep.subr.mxu0 0.0
    %420 = vmatpush1.msra.mxu0 %v145
    %421 = vmatprep.subr.mxu0 0.0
    %422 = vmatpush1.msra.mxu0 %v146
    %423 = vmatprep.subr.mxu0 0.0
    %424 = vmatpush1.msra.mxu0 %v147
    %425 = vmatprep.subr.mxu0 0.0
    %426 = vmatpush1.msra.mxu0 %v148
    %427 = vmatprep.subr.mxu0 0.0
    %428 = vmatpush1.msra.mxu0 %v149
    %429 = vmatprep.subr.mxu0 0.0
    %430 = vmatpush1.msra.mxu0 %v150
    %431 = vmatprep.subr.mxu0 0.0
    %432 = vmatpush1.msra.mxu0 %v151
    %433 = vmatprep.subr.mxu0 0.0
    %434 = vmatpush1.msra.mxu0 %v152
    %435 = vmatprep.subr.mxu0 0.0
    %436 = vmatpush1.msra.mxu0 %v153
    %437 = vmatprep.subr.mxu0 0.0
    %438 = vmatpush1.msra.mxu0 %v154
    %439 = vmatprep.subr.mxu0 0.0
    %440 = vmatpush1.msra.mxu0 %v155
    %441 = vmatprep.subr.mxu0 0.0
    %442 = vmatpush1.msra.mxu0 %v156
    %443 = vmatprep.subr.mxu0 0.0
    %444 = vmatpush1.msra.mxu0 %v157
    %445 = vmatprep.subr.mxu0 0.0
    %446 = vmatpush1.msra.mxu0 %v158
    %447 = vmatprep.subr.mxu0 0.0
    %448 = vmatpush1.msra.mxu0 %v159
    %449 = vmatprep.subr.mxu0 0.0
    %450 = vmatpush1.msra.mxu0 %v160
    %451 = vmatprep.subr.mxu0 0.0
    %452 = vmatpush1.msra.mxu0 %v161
    %453 = vmatprep.subr.mxu0 0.0
    %454 = vmatpush1.msra.mxu0 %v162
    %455 = vmatprep.subr.mxu0 0.0
    %456 = vmatpush1.msra.mxu0 %v163
    %457 = vmatprep.subr.mxu0 0.0
    %458 = vmatpush1.msra.mxu0 %v164
    %459 = vmatprep.subr.mxu0 0.0
    %460 = vmatpush1.msra.mxu0 %v165
    %461 = vmatprep.subr.mxu0 0.0
    %462 = vmatpush1.msra.mxu0 %v166
    %463 = vmatprep.subr.mxu0 0.0
    %464 = vmatpush1.msra.mxu0 %v167
    %465 = vmatprep.subr.mxu0 0.0
    %466 = vmatpush1.msra.mxu0 %v168
    %467 = vmatprep.subr.mxu0 0.0
    %468 = vmatpush1.msra.mxu0 %v169
    %469 = vmatprep.subr.mxu0 0.0
    %470 = vmatpush1.msra.mxu0 %v170
    %471 = vmatprep.subr.mxu0 0.0
    %472 = vmatpush1.msra.mxu0 %v171
    %473 = vmatprep.mubr.f32.mxu0 %v42
    %474 = vmatmul.mubr.f32.gmra.mrb[0].mxu0 %v41
    %v475 = vpop.f32.mrb[0].mxu0
    %v476 = vadd.f32 %v406, %v475
    %v477 = vpop.f32.mrb[0].mxu0
    %478 = vdwg.mxu0
    %479 = vmatprep.subr.mxu0 0.0
    %480 = vmatpush1.msra.mxu0 %v172
    %481 = vmatprep.subr.mxu0 0.0
    %482 = vmatpush1.msra.mxu0 %v173
    %483 = vmatprep.subr.mxu0 0.0
    %484 = vmatpush1.msra.mxu0 %v174
    %485 = vmatprep.subr.mxu0 0.0
    %486 = vmatpush1.msra.mxu0 %v175
    %487 = vmatprep.subr.mxu0 0.0
    %488 = vmatpush1.msra.mxu0 %v176
    %489 = vmatprep.subr.mxu0 0.0
    %490 = vmatpush1.msra.mxu0 %v177
    %491 = vmatprep.subr.mxu0 0.0
    %492 = vmatpush1.msra.mxu0 %v178
    %493 = vmatprep.subr.mxu0 0.0
    %494 = vmatpush1.msra.mxu0 %v179
    %495 = vmatprep.subr.mxu0 0.0
    %496 = vmatpush1.msra.mxu0 %v180
    %497 = vmatprep.subr.mxu0 0.0
    %498 = vmatpush1.msra.mxu0 %v181
    %499 = vmatprep.subr.mxu0 0.0
    %500 = vmatpush1.msra.mxu0 %v182
    %501 = vmatprep.subr.mxu0 0.0
    %502 = vmatpush1.msra.mxu0 %v197
    %503 = vmatprep.subr.mxu0 0.0
    %504 = vmatpush1.msra.mxu0 0.0
    %505 = vmatprep.subr.mxu0 0.0
    %506 = vmatpush1.msra.mxu0 0.0
    %507 = vmatprep.subr.mxu0 0.0
    %508 = vmatpush1.msra.mxu0 0.0
    %509 = vmatprep.subr.mxu0 0.0
    %510 = vmatpush1.msra.mxu0 0.0
    %511 = vmatprep.subr.mxu0 0.0
    %512 = vmatpush1.msra.mxu0 0.0
    %513 = vmatprep.subr.mxu0 0.0
    %514 = vmatpush1.msra.mxu0 0.0
    %515 = vmatprep.subr.mxu0 0.0
    %516 = vmatpush1.msra.mxu0 0.0
    %517 = vmatprep.subr.mxu0 0.0
    %518 = vmatpush1.msra.mxu0 0.0
    %519 = vmatprep.subr.mxu0 0.0
    %520 = vmatpush1.msra.mxu0 0.0
    %521 = vmatprep.subr.mxu0 0.0
    %522 = vmatpush1.msra.mxu0 0.0
    %523 = vmatprep.subr.mxu0 0.0
    %524 = vmatpush1.msra.mxu0 0.0
    %525 = vmatprep.subr.mxu0 0.0
    %526 = vmatpush1.msra.mxu0 0.0
    %527 = vmatprep.subr.mxu0 0.0
    %528 = vmatpush1.msra.mxu0 0.0
    %529 = vmatprep.subr.mxu0 0.0
    %530 = vmatpush1.msra.mxu0 0.0
    %531 = vmatprep.subr.mxu0 0.0
    %532 = vmatpush1.msra.mxu0 0.0
    %533 = vmatprep.subr.mxu0 0.0
    %534 = vmatpush1.msra.mxu0 0.0
    %535 = vmatprep.subr.mxu0 0.0
    %536 = vmatpush1.msra.mxu0 0.0
    %537 = vmatprep.subr.mxu0 0.0
    %538 = vmatpush1.msra.mxu0 0.0
    %539 = vmatprep.subr.mxu0 0.0
    %540 = vmatpush1.msra.mxu0 0.0
    %541 = vmatprep.subr.mxu0 0.0
    %542 = vmatpush1.msra.mxu0 0.0
    %543 = vmatprep.mubr.f32.mxu0 0.0
    %544 = vmatmul.mubr.f32.gmra.mrb[0].mxu0 %v193
    %v545 = vpop.f32.mrb[0].mxu0
    %v546 = vadd.f32 %v476, %v545
    %v547 = vpop.f32.mrb[0].mxu0
    %548 = vdwg.mxu0
    %v549 = vmax.f32 %v546, 0.0
    %v550 = vld [vmem:[%s3] sm:$0xff]
    %v551 = vld [vmem:[%s3 + $0x8] sm:$0xff]
    %v552 = vld [vmem:[%s3 + $0x10] sm:$0xff]
    %v553 = vld [vmem:[%s3 + $0x18] sm:$0xff]
    %v554 = vld [vmem:[%s3 + $0x20] sm:$0xff]
    %v555 = vld [vmem:[%s3 + $0x28] sm:$0xff]
    %v556 = vld [vmem:[%s3 + $0x30] sm:$0xff]
    %v557 = vld [vmem:[%s3 + $0x38] sm:$0xff]
    %v558 = vld [vmem:[%s3 + $0x40] sm:$0xff]
    %v559 = vld [vmem:[%s3 + $0x48] sm:$0xff]
    %v560 = vld [vmem:[%s3 + $0x50] sm:$0xff]
    %v561 = vld [vmem:[%s3 + $0x58] sm:$0xff]
    %v562 = vld [vmem:[%s3 + $0x60] sm:$0xff]
    %v563 = vld [vmem:[%s3 + $0x68] sm:$0xff]
    %v564 = vld [vmem:[%s3 + $0x70] sm:$0xff]
    %v565 = vld [vmem:[%s3 + $0x78] sm:$0xff]
    %v566 = vld [vmem:[%s4] sm:$0x1]
    %v568 = vlaneseq
    %v569 = vshrl.u32 %v568, 7
    %v570 = vsub.s32 0, %v569
    %v571 = vrot.slane %v566, %v570
    %573 = vmatprep.subr.mxu0 0.0
    %574 = vmatpush1.msra.mxu0 %v550
    %575 = vmatprep.subr.mxu0 0.0
    %576 = vmatpush1.msra.mxu0 %v551
    %577 = vmatprep.subr.mxu0 0.0
    %578 = vmatpush1.msra.mxu0 %v552
    %579 = vmatprep.subr.mxu0 0.0
    %580 = vmatpush1.msra.mxu0 %v553
    %581 = vmatprep.subr.mxu0 0.0
    %582 = vmatpush1.msra.mxu0 %v554
    %583 = vmatprep.subr.mxu0 0.0
    %584 = vmatpush1.msra.mxu0 %v555
    %585 = vmatprep.subr.mxu0 0.0
    %586 = vmatpush1.msra.mxu0 %v556
    %587 = vmatprep.subr.mxu0 0.0
    %588 = vmatpush1.msra.mxu0 %v557
    %589 = vmatprep.subr.mxu0 0.0
    %590 = vmatpush1.msra.mxu0 %v558
    %591 = vmatprep.subr.mxu0 0.0
    %592 = vmatpush1.msra.mxu0 %v559
    %593 = vmatprep.subr.mxu0 0.0
    %594 = vmatpush1.msra.mxu0 %v560
    %595 = vmatprep.subr.mxu0 0.0
    %596 = vmatpush1.msra.mxu0 %v561
    %597 = vmatprep.subr.mxu0 0.0
    %598 = vmatpush1.msra.mxu0 %v562
    %599 = vmatprep.subr.mxu0 0.0
    %600 = vmatpush1.msra.mxu0 %v563
    %601 = vmatprep.subr.mxu0 0.0
    %602 = vmatpush1.msra.mxu0 %v564
    %603 = vmatprep.subr.mxu0 0.0
    %604 = vmatpush1.msra.mxu0 %v565
    %605 = vmatprep.subr.mxu0 0.0
    %606 = vmatpush1.msra.mxu0 0.0
    %607 = vmatprep.subr.mxu0 0.0
    %608 = vmatpush1.msra.mxu0 0.0
    %609 = vmatprep.subr.mxu0 0.0
    %610 = vmatpush1.msra.mxu0 0.0
    %611 = vmatprep.subr.mxu0 0.0
    %612 = vmatpush1.msra.mxu0 0.0
    %613 = vmatprep.subr.mxu0 0.0
    %614 = vmatpush1.msra.mxu0 0.0
    %615 = vmatprep.subr.mxu0 0.0
    %616 = vmatpush1.msra.mxu0 0.0
    %617 = vmatprep.subr.mxu0 0.0
    %618 = vmatpush1.msra.mxu0 0.0
    %619 = vmatprep.subr.mxu0 0.0
    %620 = vmatpush1.msra.mxu0 0.0
    %621 = vmatprep.subr.mxu0 0.0
    %622 = vmatpush1.msra.mxu0 0.0
    %623 = vmatprep.subr.mxu0 0.0
    %624 = vmatpush1.msra.mxu0 0.0
    %625 = vmatprep.subr.mxu0 0.0
    %626 = vmatpush1.msra.mxu0 0.0
    %627 = vmatprep.subr.mxu0 0.0
    %628 = vmatpush1.msra.mxu0 0.0
    %629 = vmatprep.subr.mxu0 0.0
    %630 = vmatpush1.msra.mxu0 0.0
    %631 = vmatprep.subr.mxu0 0.0
    %632 = vmatpush1.msra.mxu0 0.0
    %633 = vmatprep.subr.mxu0 0.0
    %634 = vmatpush1.msra.mxu0 0.0
    %635 = vmatprep.subr.mxu0 0.0
    %636 = vmatpush1.msra.mxu0 0.0
    %637 = vmatprep.mubr.f32.mxu0 0.0
    %638 = vmatmul.mubr.f32.gmra.mrb[0].mxu0 %v549
    %v639 = vpop.f32.mrb[0].mxu0
    %v640 = vadd.f32 %v571, %v639
    %v641 = vpop.f32.mrb[0].mxu0
    %642 = vdwg.mxu0
    %v643 = vmax.f32 %v640, 0.0
    %vm644 = vcmask 261120
    %645 = vst.msk [vmem:[#allocation5] sm:$0xff] %vm644, %v643
    // Predicated region
    $region26: #{tpu_custom_call.1} parent=1 // pred_check
      _
    $region27: #{tpu_custom_call.1} parent=1 // pred_check_branch
      %647 = sbr.rel (0) target = $region29
    $region28: #{tpu_custom_call.1} parent=1 // pred_region
      %s649 = ssub.s32 128, 128
      %650 = vsyncadd [#allocation4], %s649
      %s652 = sshll.u32 [#allocation5], 4
      %s653 = int_to_ptr.vmem [resolvable:$true] %s652
      %655 = dma.vmem_to_hbm [thread:$0]  %s653, 128, %s5, [#allocation4]
    $region29: #{tpu_custom_call.1} parent=1 // pred_fallthru
      _
    // Predicated region
    $region30: #{tpu_custom_call.1} parent=1 // pred_check
      _
    $region31: #{tpu_custom_call.1} parent=1 // pred_check_branch
      %657 = sbr.rel (0) target = $region33
    $region32: #{tpu_custom_call.1} parent=1 // pred_region
      %658 = dma.done [#allocation4], 128
    $region33: #{tpu_custom_call.1} parent=1 // pred_fallthru
      _
    %659 = vsyncpa [#allocation3], 1
    %660 = vsyncpa [#allocation4], 1

</llo_original>
